<compile_context>
chip_gen: v5e
topology: v5e:2x2
jax: 0.10.0
libtpu: 0.0.40
codegen_flags: <defaults>
</compile_context>

<pallas_src>
import jax
import jax.numpy as jnp
from jax.experimental import pallas as pl
from jax.experimental.pallas import tpu as pltpu


def _make_kernel(g, c):
    """Kernel for a (block_rows, g*c) tile; g original rows folded per lane-row."""
    lane_width = g * c

    def kernel(x_ref, o_ref):
        x = x_ref[...].astype(jnp.float32)
        sigm = 1.0 / (1.0 + jnp.exp(-x))  # EUP exp + VPU

        if g == 1:
            # Plain per-row lane reduction (c is a multiple of 128, or c does
            # not divide 128 -> lane-sparse fallback).
            s = jnp.sum(sigm, axis=-1, keepdims=True)              # (rows, 1)
            scale = jnp.where(
                s > 1.0, pl.reciprocal(1e-12 + s, approx=False), 1.0
            )                                                      # (rows, 1)
        else:
            # Segmented reduction: each 128-lane row holds g original rows of
            # length c.  Constant 0/1 matrices (built from iota; only
            # comparisons and an i32 multiply) gather per-segment sums and
            # scatter the per-segment scale back across lanes; both matmuls
            # ride the otherwise-idle MXU and keep everything lane-dense.
            lane_i = jax.lax.broadcasted_iota(jnp.int32, (lane_width, g), 0)
            seg_i = jax.lax.broadcasted_iota(jnp.int32, (lane_width, g), 1)
            lo_i = seg_i * c
            gather = ((lane_i >= lo_i) & (lane_i < lo_i + c)).astype(jnp.float32)

            seg_j = jax.lax.broadcasted_iota(jnp.int32, (g, lane_width), 0)
            lane_j = jax.lax.broadcasted_iota(jnp.int32, (g, lane_width), 1)
            lo_j = seg_j * c
            scatter = ((lane_j >= lo_j) & (lane_j < lo_j + c)).astype(jnp.float32)

            s_seg = jnp.dot(sigm, gather,
                            preferred_element_type=jnp.float32)    # (rows, g)
            scale_seg = jnp.where(
                s_seg > 1.0, pl.reciprocal(1e-12 + s_seg, approx=False), 1.0
            )                                                      # (rows, g)
            scale = jnp.dot(scale_seg, scatter,
                            preferred_element_type=jnp.float32)    # (rows, lw)

        o_ref[...] = (sigm * scale).astype(o_ref.dtype)

    return kernel


def sigmoid_distribution(x, *, vmem_target_bytes=2 * 1024 * 1024):
    """x: (a, b, c) array -> same shape, normalized sigmoid distribution."""
    a, b, c = x.shape
    orig_dtype = x.dtype
    itemsize = jnp.dtype(orig_dtype).itemsize

    # --- layout plumbing: collapse (a, b) into a single row axis -------------
    n_rows = a * b
    x2 = x.reshape(n_rows, c)

    # Fold g consecutive rows into one 128-lane row when c divides 128.
    if c < 128 and 128 % c == 0:
        g = 128 // c
    else:
        g = 1
    lane_width = g * c

    rows_pad = pl.cdiv(n_rows, g) * g
    if rows_pad != n_rows:
        # Rare: only when a*b is not a multiple of g.  Padded rows occupy their
        # own lane segments, never mix with real rows, and are cropped below.
        x2 = jnp.pad(x2, ((0, rows_pad - n_rows), (0, 0)))
    rf = rows_pad // g                      # folded row count
    xf = x2.reshape(rf, lane_width)         # contiguous -> free reshape

    # --- pick the row tile: biggest that respects the VMEM budget ------------
    # Sublane granule: 8 for 4-byte, 16 for 2-byte, 32 for 1-byte dtypes.
    granule = max(8, 32 // itemsize)
    block_rows = vmem_target_bytes // max(1, lane_width * itemsize)
    block_rows = max(granule, min(1024, block_rows))
    block_rows = (block_rows // granule) * granule
    if rf <= block_rows:
        block_rows = rf                     # single full-extent block (legal)
        grid_rows = 1
    else:
        grid_rows = pl.cdiv(rf, block_rows)  # ragged last block handled by Pallas

    block_bytes = block_rows * lane_width * itemsize
    # in + out double buffers + f32 temps, with headroom; stays under the v7x
    # 64 MiB physical VMEM while still allowing large tiles on v5e/v6e.
    vmem_limit = int(min(64 * 1024 * 1024,
                         max(16 * 1024 * 1024, 12 * block_bytes)))

    kernel = _make_kernel(g, c)
    out_f = pl.pallas_call(
        kernel,
        out_shape=jax.ShapeDtypeStruct((rf, lane_width), orig_dtype),
        grid_spec=pltpu.PrefetchScalarGridSpec(
            num_scalar_prefetch=0,
            grid=(grid_rows,),
            # TODO(synk): if profiles show exposed input DMA for very small c,
            # bump input pipelining depth with pipeline_mode=pl.Buffered(3).
            in_specs=[pl.BlockSpec((block_rows, lane_width), lambda i: (i, 0))],
            out_specs=pl.BlockSpec((block_rows, lane_width), lambda i: (i, 0)),
        ),
        compiler_params=pltpu.CompilerParams(
            dimension_semantics=("parallel",),
            vmem_limit_bytes=vmem_limit,
        ),
    )(xf)

    out = out_f.reshape(rows_pad, c)
    if rows_pad != n_rows:
        out = out[:n_rows]
    return out.reshape(a, b, c)


def _reference(x):
    sigm = jax.nn.sigmoid(x.astype(jnp.float32))
    s = jnp.sum(sigm, axis=-1, keepdims=True)
    norm = sigm / (1e-12 + s)
    return jnp.where(s > 1.0, norm, sigm).astype(x.dtype)


if __name__ == "__main__":
    key = jax.random.PRNGKey(0)
    a, b, c = 2, 8, 32
    x = jax.random.normal(key, (a, b, c), dtype=jnp.float32)

    out = sigmoid_distribution(x)
    out = jax.block_until_ready(out)

    ref = _reference(x)
    assert out.shape == (a, b, c)
    assert jnp.allclose(out, ref, atol=1e-5, rtol=1e-5), "mismatch vs reference"

    print("KERNEL_OK")
</pallas_src>

<mosaic_0001>
module attributes {stable_mosaic.version = 11 : i64} {
  func.func @kernel(%arg0: i32, %arg1: memref<4x128xf32, #tpu.memory_space<vmem>>, %arg2: memref<4x128xf32, #tpu.memory_space<vmem>>) attributes {dimension_semantics = [#tpu.dimension_semantics<parallel>], iteration_bounds = array<i64: 1>, scalar_prefetch = 0 : i64, scratch_operands = 0 : i64, tpu.core_type = #tpu.core_type<tc>, window_params = [{transform_indices = @transform_0, window_bounds = array<i64: 4, 128>}, {transform_indices = @transform_1, window_bounds = array<i64: 4, 128>}]} {
    %c0 = arith.constant 0 : index
    %c0_0 = arith.constant 0 : index
    %0 = vector.load %arg1[%c0, %c0_0] : memref<4x128xf32, #tpu.memory_space<vmem>>, vector<4x128xf32>
    %cst = arith.constant 0.000000e+00 : f32
    %1 = vector.broadcast %cst : f32 to vector<4x128xf32>
    %2 = arith.subf %1, %0 : vector<4x128xf32>
    %3 = math.exp %2 : vector<4x128xf32>
    %cst_1 = arith.constant 1.000000e+00 : f32
    %4 = vector.broadcast %cst_1 : f32 to vector<4x128xf32>
    %5 = arith.addf %4, %3 : vector<4x128xf32>
    %cst_2 = arith.constant 1.000000e+00 : f32
    %6 = vector.broadcast %cst_2 : f32 to vector<4x128xf32>
    %7 = arith.divf %6, %5 : vector<4x128xf32>
    %8 = tpu.iota {dimensions = array<i32: 0>} : vector<128x4xi32>
    %9 = tpu.iota {dimensions = array<i32: 1>} : vector<128x4xi32>
    %c32_i32 = arith.constant 32 : i32
    %10 = vector.broadcast %c32_i32 : i32 to vector<128x4xi32>
    %11 = arith.muli %9, %10 : vector<128x4xi32>
    %12 = arith.cmpi sge, %8, %11 : vector<128x4xi32>
    %c32_i32_3 = arith.constant 32 : i32
    %13 = vector.broadcast %c32_i32_3 : i32 to vector<128x4xi32>
    %14 = arith.addi %11, %13 : vector<128x4xi32>
    %15 = arith.cmpi slt, %8, %14 : vector<128x4xi32>
    %16 = arith.andi %12, %15 : vector<128x4xi1>
    %17 = arith.extui %16 : vector<128x4xi1> to vector<128x4xi32>
    %18 = arith.sitofp %17 : vector<128x4xi32> to vector<128x4xf32>
    %19 = tpu.iota {dimensions = array<i32: 0>} : vector<4x128xi32>
    %20 = tpu.iota {dimensions = array<i32: 1>} : vector<4x128xi32>
    %c32_i32_4 = arith.constant 32 : i32
    %21 = vector.broadcast %c32_i32_4 : i32 to vector<4x128xi32>
    %22 = arith.muli %19, %21 : vector<4x128xi32>
    %23 = arith.cmpi sge, %20, %22 : vector<4x128xi32>
    %c32_i32_5 = arith.constant 32 : i32
    %24 = vector.broadcast %c32_i32_5 : i32 to vector<4x128xi32>
    %25 = arith.addi %22, %24 : vector<4x128xi32>
    %26 = arith.cmpi slt, %20, %25 : vector<4x128xi32>
    %27 = arith.andi %23, %26 : vector<4x128xi1>
    %28 = arith.extui %27 : vector<4x128xi1> to vector<4x128xi32>
    %29 = arith.sitofp %28 : vector<4x128xi32> to vector<4x128xf32>
    %cst_6 = arith.constant dense<0.000000e+00> : vector<4x4xf32>
    %30 = tpu.matmul %7, %18, %cst_6 {dimension_numbers = #tpu.dot_dimension_numbers<[1], [0], [0], [1], [0, 0, 1, 1], [], []>} : vector<4x128xf32>, vector<128x4xf32>, vector<4x4xf32> -> vector<4x4xf32>
    %cst_7 = arith.constant 1.000000e+00 : f32
    %31 = vector.broadcast %cst_7 : f32 to vector<4x4xf32>
    %32 = arith.cmpf ogt, %30, %31 : vector<4x4xf32>
    %cst_8 = arith.constant 9.99999996E-13 : f32
    %33 = vector.broadcast %cst_8 : f32 to vector<4x4xf32>
    %34 = arith.addf %33, %30 : vector<4x4xf32>
    %35 = tpu.reciprocal %34 : vector<4x4xf32> -> vector<4x4xf32>
    %cst_9 = arith.constant 1.000000e+00 : f32
    %36 = vector.broadcast %cst_9 : f32 to vector<4x4xf32>
    %37 = arith.select %32, %35, %36 : vector<4x4xi1>, vector<4x4xf32>
    %cst_10 = arith.constant dense<0.000000e+00> : vector<4x128xf32>
    %38 = tpu.matmul %37, %29, %cst_10 {dimension_numbers = #tpu.dot_dimension_numbers<[1], [0], [0], [1], [0, 0, 1, 1], [], []>} : vector<4x4xf32>, vector<4x128xf32>, vector<4x128xf32> -> vector<4x128xf32>
    %39 = arith.mulf %7, %38 : vector<4x128xf32>
    %c0_11 = arith.constant 0 : index
    %c0_12 = arith.constant 0 : index
    %40 = vector.load %arg2[%c0_11, %c0_12] : memref<4x128xf32, #tpu.memory_space<vmem>>, vector<4x128xf32>
    tpu.vector_store %arg2[%c0_11, %c0_12], %39 {strides = array<i32>} : memref<4x128xf32, #tpu.memory_space<vmem>>, vector<4x128xf32>,
    return
  }
  func.func @transform_0(%arg0: i32) -> (i32, i32) {
    %c0_i32 = arith.constant 0 : i32
    %c0_i32_0 = arith.constant 0 : i32
    return %arg0, %c0_i32 : i32, i32
  }
  func.func @transform_1(%arg0: i32) -> (i32, i32) {
    %c0_i32 = arith.constant 0 : i32
    %c0_i32_0 = arith.constant 0 : i32
    return %arg0, %c0_i32 : i32, i32
  }
}

</mosaic_0001>

<llo_original>
// kernel: tpu_custom_call.1
$region0: #{tpu_custom_call.1}
  #allocation0 [shape = 'u32[]', space=smem, size = 0x4, offset = 0x4, fixed_abs, tag = 'smem constant byte address 0x4 - core index']
  #allocation1 [shape = 'u32[72,128]{1,0:T(1,128)}', space=vmem, size = 0x9000, scoped, tag = 'internal scratch']
  %s0 = inlined_call_operand.hbm [shape: f32[4,128], index: 0, kind: input, shape index: {}]
  %s1 = inlined_call_operand.hbm [shape: f32[4,128], index: 1, kind: output, shape index: {}]
  %s2 = sld [smem:[#allocation0]]
  $region18: #{tpu_custom_call.1} parent=0
    _
  %s4 = ssub.s32 1, %s2
  %s5 = scalar_select 0, %s4, %s2
  $region1: #{tpu_custom_call.1} parent=0
    #allocation2 [shape = 'u8[2048]{0}', space=vmem, size = 0x800, scoped, tag = 'input window, operand 0, single buffered']
    #allocation3 [shape = 's32[1]{0}', space=sflag, size = 0x4, scoped, tag = 'scoped memory for tpu_custom_call.1']
    #allocation4 [shape = 's32[1]{0}', space=sflag, size = 0x4, scoped, tag = 'scoped memory for tpu_custom_call.1']
    #allocation5 [shape = 'u8[2048]{0}', space=vmem, size = 0x800, scoped, tag = 'output window, operand 0, single buffered']
    %6 = vsyncpa [#allocation3], 0
    %7 = vsyncpa [#allocation4], 0
    // Predicated region
    $region2: #{tpu_custom_call.1} parent=1 // pred_check
      _
    $region3: #{tpu_custom_call.1} parent=1 // pred_check_branch
      %9 = sbr.rel (0) target = $region5
    $region4: #{tpu_custom_call.1} parent=1 // pred_region
      %11 = vsyncadd [#allocation3], 0
      %s13 = sshll.u32 %s0, 4
      %s14 = int_to_ptr.hbm [resolvable:$true] %s13
      %s15 = sshll.u32 [#allocation2], 4
      %s16 = int_to_ptr.vmem [resolvable:$true] %s15
      %18 = dma.hbm_to_vmem [thread:$0]  %s14, 64, %s16, [#allocation3]
    $region5: #{tpu_custom_call.1} parent=1 // pred_fallthru
      _
    // Predicated region
    $region6: #{tpu_custom_call.1} parent=1 // pred_check
      _
    $region7: #{tpu_custom_call.1} parent=1 // pred_check_branch
      %20 = sbr.rel (0) target = $region9
    $region8: #{tpu_custom_call.1} parent=1 // pred_region
      %22 = dma.done [#allocation3], 64
    $region9: #{tpu_custom_call.1} parent=1 // pred_fallthru
      _
    %v23 = vld [vmem:[#allocation2] sm:$0xf]
    %v24 = vsub.f32 0.0, %v23
    %v25 = vmul.f32 %v24, 1.442695
    %v26 = vpow.pop %v25
    %v27 = vadd.f32 %v26, 1.0
    %v28 = vrcp.pop %v27
    %v29 = vmul.f32 %v27, %v28
    %v30 = vsub.f32 1.0, %v29
    %v31 = vmul.f32 %v28, %v30
    %v32 = vadd.f32 %v28, %v31
    %vm33 = vweird.f32 %v27
    %vm34 = vweird.f32 %v28
    %vm35 = vmor %vm33, %vm34
    %v36 = vsel %vm35, %v28, %v32
    %v37 = vand.u32 2147483647, %v27
    %vm38 = vcmp.eq.f32.partialorder %v37, 8.507059e+37
    %v39 = vand.u32 %v27, 2147483648
    %v40 = vor.u32 1.1754944e-38, %v39
    %v41 = vsel %vm38, %v40, %v36
    %v42 = vmul.f32 1.0, %v41
    %v43 = vlaneseq
    %v44 = vshrl.u32 %v43, 7
    %v45 = vadd.s32 %v44, 8
    %v46 = vadd.s32 %v44, 16
    %v47 = vadd.s32 %v44, 24
    %v48 = vadd.s32 %v44, 32
    %v49 = vadd.s32 %v44, 40
    %v50 = vadd.s32 %v44, 48
    %v51 = vadd.s32 %v44, 56
    %v52 = vadd.s32 %v44, 64
    %v53 = vadd.s32 %v44, 72
    %v54 = vadd.s32 %v44, 80
    %v55 = vadd.s32 %v44, 88
    %v56 = vadd.s32 %v44, 96
    %v57 = vadd.s32 %v44, 104
    %v58 = vadd.s32 %v44, 112
    %v59 = vadd.s32 %v44, 120
    %v60 = vlaneseq
    %v61 = vand.u32 %v60, 127
    %v62 = vmul.u32 %v61, 32
    %vm63 = vcmp.ge.s32.totalorder %v44, %v62
    %vm64 = vcmp.ge.s32.totalorder %v45, %v62
    %vm65 = vcmp.ge.s32.totalorder %v46, %v62
    %vm66 = vcmp.ge.s32.totalorder %v47, %v62
    %vm67 = vcmp.ge.s32.totalorder %v48, %v62
    %vm68 = vcmp.ge.s32.totalorder %v49, %v62
    %vm69 = vcmp.ge.s32.totalorder %v50, %v62
    %vm70 = vcmp.ge.s32.totalorder %v51, %v62
    %vm71 = vcmp.ge.s32.totalorder %v52, %v62
    %vm72 = vcmp.ge.s32.totalorder %v53, %v62
    %vm73 = vcmp.ge.s32.totalorder %v54, %v62
    %vm74 = vcmp.ge.s32.totalorder %v55, %v62
    %vm75 = vcmp.ge.s32.totalorder %v56, %v62
    %vm76 = vcmp.ge.s32.totalorder %v57, %v62
    %vm77 = vcmp.ge.s32.totalorder %v58, %v62
    %vm78 = vcmp.ge.s32.totalorder %v59, %v62
    %v79 = vadd.s32 %v62, 32
    %vm80 = vcmp.lt.s32.totalorder %v44, %v79
    %vm81 = vcmp.lt.s32.totalorder %v45, %v79
    %vm82 = vcmp.lt.s32.totalorder %v46, %v79
    %vm83 = vcmp.lt.s32.totalorder %v47, %v79
    %vm84 = vcmp.lt.s32.totalorder %v48, %v79
    %vm85 = vcmp.lt.s32.totalorder %v49, %v79
    %vm86 = vcmp.lt.s32.totalorder %v50, %v79
    %vm87 = vcmp.lt.s32.totalorder %v51, %v79
    %vm88 = vcmp.lt.s32.totalorder %v52, %v79
    %vm89 = vcmp.lt.s32.totalorder %v53, %v79
    %vm90 = vcmp.lt.s32.totalorder %v54, %v79
    %vm91 = vcmp.lt.s32.totalorder %v55, %v79
    %vm92 = vcmp.lt.s32.totalorder %v56, %v79
    %vm93 = vcmp.lt.s32.totalorder %v57, %v79
    %vm94 = vcmp.lt.s32.totalorder %v58, %v79
    %vm95 = vcmp.lt.s32.totalorder %v59, %v79
    %vm96 = vmand %vm63, %vm80
    %vm97 = vmand %vm64, %vm81
    %vm98 = vmand %vm65, %vm82
    %vm99 = vmand %vm66, %vm83
    %vm100 = vmand %vm67, %vm84
    %vm101 = vmand %vm68, %vm85
    %vm102 = vmand %vm69, %vm86
    %vm103 = vmand %vm70, %vm87
    %vm104 = vmand %vm71, %vm88
    %vm105 = vmand %vm72, %vm89
    %vm106 = vmand %vm73, %vm90
    %vm107 = vmand %vm74, %vm91
    %vm108 = vmand %vm75, %vm92
    %vm109 = vmand %vm76, %vm93
    %vm110 = vmand %vm77, %vm94
    %vm111 = vmand %vm78, %vm95
    %v112 = vsel %vm96, 1, 0
    %v113 = vsel %vm97, 1, 0
    %v114 = vsel %vm98, 1, 0
    %v115 = vsel %vm99, 1, 0
    %v116 = vsel %vm100, 1, 0
    %v117 = vsel %vm101, 1, 0
    %v118 = vsel %vm102, 1, 0
    %v119 = vsel %vm103, 1, 0
    %v120 = vsel %vm104, 1, 0
    %v121 = vsel %vm105, 1, 0
    %v122 = vsel %vm106, 1, 0
    %v123 = vsel %vm107, 1, 0
    %v124 = vsel %vm108, 1, 0
    %v125 = vsel %vm109, 1, 0
    %v126 = vsel %vm110, 1, 0
    %v127 = vsel %vm111, 1, 0
    %v128 = vcvt.s32.f32 %v112
    %v129 = vcvt.s32.f32 %v113
    %v130 = vcvt.s32.f32 %v114
    %v131 = vcvt.s32.f32 %v115
    %v132 = vcvt.s32.f32 %v116
    %v133 = vcvt.s32.f32 %v117
    %v134 = vcvt.s32.f32 %v118
    %v135 = vcvt.s32.f32 %v119
    %v136 = vcvt.s32.f32 %v120
    %v137 = vcvt.s32.f32 %v121
    %v138 = vcvt.s32.f32 %v122
    %v139 = vcvt.s32.f32 %v123
    %v140 = vcvt.s32.f32 %v124
    %v141 = vcvt.s32.f32 %v125
    %v142 = vcvt.s32.f32 %v126
    %v143 = vcvt.s32.f32 %v127
    %v144 = vmul.u32 %v44, 32
    %vm145 = vcmp.ge.s32.totalorder %v61, %v144
    %v146 = vadd.s32 %v144, 32
    %vm147 = vcmp.lt.s32.totalorder %v61, %v146
    %vm148 = vmand %vm145, %vm147
    %v149 = vsel %vm148, 1, 0
    %v150 = vcvt.s32.f32 %v149
    %151 = vmatpush.msra.mxu0 %v143
    %152 = vmatpush.msra.mxu0 %v142
    %153 = vmatpush.msra.mxu0 %v141
    %154 = vmatpush.msra.mxu0 %v140
    %155 = vmatpush.msra.mxu0 %v139
    %156 = vmatpush.msra.mxu0 %v138
    %157 = vmatpush.msra.mxu0 %v137
    %158 = vmatpush.msra.mxu0 %v136
    %159 = vmatpush.msra.mxu0 %v135
    %160 = vmatpush.msra.mxu0 %v134
    %161 = vmatpush.msra.mxu0 %v133
    %162 = vmatpush.msra.mxu0 %v132
    %163 = vmatpush.msra.mxu0 %v131
    %164 = vmatpush.msra.mxu0 %v130
    %165 = vmatpush.msra.mxu0 %v129
    %166 = vmatpush.msra.mxu0 %v128
    %167 = vmatmul.f32.gmra.mxu0 %v42
    %v168 = vpop.f32.mrf.mxu0
    %v169 = vadd.f32 0.0, %v168
    %170 = vdwg.mxu0
    %vm171 = vcmp.gt.f32.partialorder %v169, 1.0
    %v172 = vadd.f32 %v169, 1e-12
    %v173 = vrcp.pop %v172
    %v174 = vmul.f32 %v172, %v173
    %v175 = vsub.f32 1.0, %v174
    %v176 = vmul.f32 %v173, %v175
    %v177 = vadd.f32 %v173, %v176
    %vm178 = vweird.f32 %v172
    %vm179 = vweird.f32 %v173
    %vm180 = vmor %vm178, %vm179
    %v181 = vsel %vm180, %v173, %v177
    %v182 = vand.u32 2147483647, %v172
    %vm183 = vcmp.eq.f32.partialorder %v182, 8.507059e+37
    %v184 = vand.u32 %v172, 2147483648
    %v185 = vor.u32 1.1754944e-38, %v184
    %v186 = vsel %vm183, %v185, %v181
    %v187 = vsel %vm171, %v186, 1.0
    %vm188 = vcmask 31744
    %v190 = vsel %vm188, %v187, 0
    %vm192 = vcmask 1043456
    %v194 = vsel %vm192, %v150, 0
    %196 = vmatpush.msra.mxu0 0.0
    %197 = vmatpush.msra.mxu0 0.0
    %198 = vmatpush.msra.mxu0 0.0
    %199 = vmatpush.msra.mxu0 0.0
    %200 = vmatpush.msra.mxu0 0.0
    %201 = vmatpush.msra.mxu0 0.0
    %202 = vmatpush.msra.mxu0 0.0
    %203 = vmatpush.msra.mxu0 0.0
    %204 = vmatpush.msra.mxu0 0.0
    %205 = vmatpush.msra.mxu0 0.0
    %206 = vmatpush.msra.mxu0 0.0
    %207 = vmatpush.msra.mxu0 0.0
    %208 = vmatpush.msra.mxu0 0.0
    %209 = vmatpush.msra.mxu0 0.0
    %210 = vmatpush.msra.mxu0 0.0
    %211 = vmatpush.msra.mxu0 %v194
    %212 = vmatmul.f32.gmra.mxu0 %v190
    %v213 = vpop.f32.mrf.mxu0
    %v214 = vadd.f32 0.0, %v213
    %215 = vdwg.mxu0
    %v216 = vmul.f32 %v42, %v214
    %217 = vst [vmem:[#allocation5] sm:$0xf] %v216
    // Predicated region
    $region10: #{tpu_custom_call.1} parent=1 // pred_check
      _
    $region11: #{tpu_custom_call.1} parent=1 // pred_check_branch
      %219 = sbr.rel (0) target = $region13
    $region12: #{tpu_custom_call.1} parent=1 // pred_region
      %221 = vsyncadd [#allocation4], 0
      %s223 = sshll.u32 [#allocation5], 4
      %s224 = int_to_ptr.vmem [resolvable:$true] %s223
      %s225 = sshll.u32 %s1, 4
      %s226 = int_to_ptr.hbm [resolvable:$true] %s225
      %228 = dma.vmem_to_hbm [thread:$0]  %s224, 64, %s226, [#allocation4]
    $region13: #{tpu_custom_call.1} parent=1 // pred_fallthru
      _
    // Predicated region
    $region14: #{tpu_custom_call.1} parent=1 // pred_check
      _
    $region15: #{tpu_custom_call.1} parent=1 // pred_check_branch
      %230 = sbr.rel (0) target = $region17
    $region16: #{tpu_custom_call.1} parent=1 // pred_region
      %232 = dma.done [#allocation4], 64
    $region17: #{tpu_custom_call.1} parent=1 // pred_fallthru
      _
    %233 = vsyncpa [#allocation3], 1
    %234 = vsyncpa [#allocation4], 1

</llo_original>
